<compile_context>
chip_gen: v5e
topology: v5e:2x2
jax: 0.10.0
libtpu: 0.0.40
codegen_flags: <defaults>
</compile_context>

<pallas_src>
import jax
import jax.numpy as jnp
from jax.experimental import pallas as pl
from jax.experimental.pallas import tpu as pltpu


def _round_up(x, m):
    return (x + m - 1) // m * m


def time_encoder_kernel(t_ref, w_ref, b_ref, o_ref):
    # t_ref: (TN, 1)   w_ref: (1, E)   b_ref: (1, E)   o_ref: (TN, E)
    # VPU broadcast multiply-add: (TN,1) * (1,E) + (1,E) -> (TN,E).
    o_ref[...] = (t_ref[...] * w_ref[...] + b_ref[...]).astype(o_ref.dtype)


def time_encoder(time_intervals, weight, bias, *, tile_rows=1024):
    """Pallas equivalent of TimeEncoder.forward.

    time_intervals: (B, S, 1) float32
    weight:         (E, 1)    float32   (PyTorch nn.Linear weight layout)
    bias:           (E,)      float32
    returns:        (B, S, E) float32
    """
    B, S, one = time_intervals.shape
    assert one == 1
    E = weight.shape[0]
    N = B * S

    # Row tile: multiple of 8 sublanes; small inputs collapse to one block.
    TN = min(tile_rows, _round_up(N, 8))
    N_pad = _round_up(N, TN)

    t_flat = time_intervals.reshape(N, 1)
    if N_pad != N:
        t_flat = jnp.pad(t_flat, ((0, N_pad - N), (0, 0)))
    w_row = weight.reshape(E, 1).T        # (1, E)
    b_row = bias.reshape(1, E)            # (1, E)

    grid = (N_pad // TN,)

    # Per-step VMEM footprint (double-buffered out + in tiles, resident params).
    tile_bytes = 2 * (TN * E * 4 + TN * 4) + 2 * (2 * E * 4)
    # Leave headroom but stay within v7x's smaller default scoped VMEM.
    vmem_limit = int(min(32 << 20, max(8 << 20, 4 * tile_bytes)))

    out_flat = pl.pallas_call(
        time_encoder_kernel,
        out_shape=jax.ShapeDtypeStruct((N_pad, E), jnp.float32),
        grid=grid,
        in_specs=[
            pl.BlockSpec((TN, 1), lambda i: (i, 0)),   # row tile of t
            pl.BlockSpec((1, E), lambda i: (0, 0)),    # weight row, resident
            pl.BlockSpec((1, E), lambda i: (0, 0)),    # bias row, resident
        ],
        out_specs=pl.BlockSpec((TN, E), lambda i: (i, 0)),
        compiler_params=pltpu.CompilerParams(
            dimension_semantics=("parallel",),
            vmem_limit_bytes=vmem_limit,
        ),
        cost_estimate=pl.CostEstimate(
            flops=2 * N_pad * E,
            transcendentals=0,
            bytes_accessed=4 * N_pad + 4 * N_pad * E + 8 * E,
        ),
    )(t_flat, w_row, b_row)

    if N_pad != N:
        out_flat = out_flat[:N]
    return out_flat.reshape(B, S, E)


if __name__ == "__main__":
    key = jax.random.PRNGKey(0)
    k_t, k_w, k_b = jax.random.split(key, 3)

    batch, seq, embed_dim = 2, 8, 16

    # Deterministic "parameters" (same shapes as nn.Linear(1, embed_dim)).
    weight = jax.random.normal(k_w, (embed_dim, 1), dtype=jnp.float32) * 0.5
    bias = jax.random.normal(k_b, (embed_dim,), dtype=jnp.float32) * 0.1

    # Example time-interval input, shape (B, S, 1).
    time_intervals = jax.random.uniform(k_t, (batch, seq, 1), dtype=jnp.float32)

    out = time_encoder(time_intervals, weight, bias)
    out = jax.block_until_ready(out)

    # Reference check in plain JAX (same math as the PyTorch module).
    ref = time_intervals @ weight.T + bias
    assert out.shape == (batch, seq, embed_dim)
    assert jnp.allclose(out, ref, atol=1e-5, rtol=1e-5)

    print("KERNEL_OK")
</pallas_src>

<mosaic_0001>
module attributes {stable_mosaic.version = 11 : i64} {
  func.func @time_encoder_kernel(%arg0: i32, %arg1: memref<16x1xf32, #tpu.memory_space<vmem>>, %arg2: memref<1x16xf32, #tpu.memory_space<vmem>>, %arg3: memref<1x16xf32, #tpu.memory_space<vmem>>, %arg4: memref<16x16xf32, #tpu.memory_space<vmem>>) attributes {dimension_semantics = [#tpu.dimension_semantics<parallel>], iteration_bounds = array<i64: 1>, scalar_prefetch = 0 : i64, scratch_operands = 0 : i64, tpu.core_type = #tpu.core_type<tc>, window_params = [{transform_indices = @transform_0, window_bounds = array<i64: 16, 1>}, {pipeline_mode = #tpu.pipeline_mode<synchronous>, transform_indices = @transform_1, window_bounds = array<i64: 1, 16>}, {pipeline_mode = #tpu.pipeline_mode<synchronous>, transform_indices = @transform_2, window_bounds = array<i64: 1, 16>}, {transform_indices = @transform_3, window_bounds = array<i64: 16, 16>}]} {
    %c0 = arith.constant 0 : index
    %c0_0 = arith.constant 0 : index
    %0 = vector.load %arg1[%c0, %c0_0] : memref<16x1xf32, #tpu.memory_space<vmem>>, vector<16x1xf32>
    %c0_1 = arith.constant 0 : index
    %c0_2 = arith.constant 0 : index
    %1 = vector.load %arg2[%c0_1, %c0_2] : memref<1x16xf32, #tpu.memory_space<vmem>>, vector<1x16xf32>
    %2 = vector.broadcast %0 : vector<16x1xf32> to vector<16x16xf32>
    %3 = vector.broadcast %1 : vector<1x16xf32> to vector<16x16xf32>
    %4 = arith.mulf %2, %3 : vector<16x16xf32>
    %c0_3 = arith.constant 0 : index
    %c0_4 = arith.constant 0 : index
    %5 = vector.load %arg3[%c0_3, %c0_4] : memref<1x16xf32, #tpu.memory_space<vmem>>, vector<1x16xf32>
    %6 = vector.broadcast %5 : vector<1x16xf32> to vector<16x16xf32>
    %7 = arith.addf %4, %6 : vector<16x16xf32>
    %c0_5 = arith.constant 0 : index
    %c0_6 = arith.constant 0 : index
    %8 = vector.load %arg4[%c0_5, %c0_6] : memref<16x16xf32, #tpu.memory_space<vmem>>, vector<16x16xf32>
    tpu.vector_store %arg4[%c0_5, %c0_6], %7 {strides = array<i32>} : memref<16x16xf32, #tpu.memory_space<vmem>>, vector<16x16xf32>,
    return
  }
  func.func @transform_0(%arg0: i32) -> (i32, i32) {
    %c0_i32 = arith.constant 0 : i32
    %c0_i32_0 = arith.constant 0 : i32
    return %arg0, %c0_i32 : i32, i32
  }
  func.func @transform_1(%arg0: i32) -> (i32, i32) {
    %c0_i32 = arith.constant 0 : i32
    %c0_i32_0 = arith.constant 0 : i32
    %c0_i32_1 = arith.constant 0 : i32
    return %c0_i32, %c0_i32_0 : i32, i32
  }
  func.func @transform_2(%arg0: i32) -> (i32, i32) {
    %c0_i32 = arith.constant 0 : i32
    %c0_i32_0 = arith.constant 0 : i32
    %c0_i32_1 = arith.constant 0 : i32
    return %c0_i32, %c0_i32_0 : i32, i32
  }
  func.func @transform_3(%arg0: i32) -> (i32, i32) {
    %c0_i32 = arith.constant 0 : i32
    %c0_i32_0 = arith.constant 0 : i32
    return %arg0, %c0_i32 : i32, i32
  }
}

</mosaic_0001>

<llo_original>
// kernel: tpu_custom_call.1
$region0: #{tpu_custom_call.1}
  #allocation0 [shape = 'u32[]', space=smem, size = 0x4, offset = 0x4, fixed_abs, tag = 'smem constant byte address 0x4 - core index']
  #allocation1 [shape = 'u32[72,128]{1,0:T(1,128)}', space=vmem, size = 0x9000, scoped, tag = 'internal scratch']
  %s0 = inlined_call_operand.vmem [shape: f32[16,1], index: 0, kind: input, shape index: {}]
  %s1 = inlined_call_operand.vmem [shape: f32[1,16], index: 1, kind: input, shape index: {}]
  %s2 = inlined_call_operand.vmem [shape: f32[1,16], index: 2, kind: input, shape index: {}]
  %s3 = inlined_call_operand.hbm [shape: f32[16,16], index: 3, kind: output, shape index: {}]
  %s4 = sld [smem:[#allocation0]]
  $region22: #{tpu_custom_call.1} parent=0
    _
  %s6 = ssub.s32 1, %s4
  %s7 = scalar_select 0, %s6, %s4
  $region1: #{tpu_custom_call.1} parent=0
    #allocation2 [shape = 'u8[8192]{0}', space=vmem, size = 0x2000, scoped, tag = 'output window, operand 0, single buffered']
    #allocation3 [shape = 's32[1]{0}', space=sflag, size = 0x4, scoped, tag = 'scoped memory for tpu_custom_call.1']
    %8 = vsyncpa [#allocation3], 0
    // Predicated region
    $region2: #{tpu_custom_call.1} parent=1 // pred_check
      _
    $region3: #{tpu_custom_call.1} parent=1 // pred_check_branch
      %10 = sbr.rel (0) target = $region5
    $region4: #{tpu_custom_call.1} parent=1 // pred_region
      _
    $region5: #{tpu_custom_call.1} parent=1 // pred_fallthru
      _
    // Predicated region
    $region6: #{tpu_custom_call.1} parent=1 // pred_check
      _
    $region7: #{tpu_custom_call.1} parent=1 // pred_check_branch
      %12 = sbr.rel (0) target = $region9
    $region8: #{tpu_custom_call.1} parent=1 // pred_region
      _
    $region9: #{tpu_custom_call.1} parent=1 // pred_fallthru
      _
    // Predicated region
    $region10: #{tpu_custom_call.1} parent=1 // pred_check
      _
    $region11: #{tpu_custom_call.1} parent=1 // pred_check_branch
      %14 = sbr.rel (0) target = $region13
    $region12: #{tpu_custom_call.1} parent=1 // pred_region
      _
    $region13: #{tpu_custom_call.1} parent=1 // pred_fallthru
      _
    %v15 = vld [vmem:[%s0] sm:$0xff]
    %v16 = vld [vmem:[%s0 + $0x8] sm:$0xff]
    %v17 = vld [vmem:[%s1] sm:$0x1]
    %19 = vset.pattern.permute.xlu0 0
    %20 = vperm.xlu0 %19, %v15
    %v21 = vpop.permute.xlu0 %20
    %24 = vset.pattern.permute.xlu0 0
    %25 = vperm.xlu0 %24, %v16
    %v26 = vpop.permute.xlu0 %25
    %v29 = vperm.slane %v17, 0
    %v31 = vmul.f32 %v21, %v29
    %v32 = vmul.f32 %v26, %v29
    %v33 = vld [vmem:[%s2] sm:$0x1]
    %v35 = vperm.slane %v33, 0
    %v37 = vadd.f32 %v31, %v35
    %v38 = vadd.f32 %v32, %v35
    %vm39 = vcmask 130048
    %40 = vst.msk [vmem:[#allocation2] sm:$0xff] %vm39, %v37
    %41 = vst.msk [vmem:[#allocation2 + $0x8] sm:$0xff] %vm39, %v38
    // Predicated region
    $region14: #{tpu_custom_call.1} parent=1 // pred_check
      _
    $region15: #{tpu_custom_call.1} parent=1 // pred_check_branch
      %43 = sbr.rel (0) target = $region17
    $region16: #{tpu_custom_call.1} parent=1 // pred_region
      %45 = vsyncadd [#allocation3], 0
      %s46 = sshll.u32 [#allocation2], 4
      %s47 = int_to_ptr.vmem [resolvable:$true] %s46
      %s48 = sshll.u32 %s3, 4
      %s49 = int_to_ptr.hbm [resolvable:$true] %s48
      %54 = dma.vmem_to_hbm [thread:$0]  %s47, 256, %s49, [#allocation3], 128, 128, 8
    $region17: #{tpu_custom_call.1} parent=1 // pred_fallthru
      _
    // Predicated region
    $region18: #{tpu_custom_call.1} parent=1 // pred_check
      _
    $region19: #{tpu_custom_call.1} parent=1 // pred_check_branch
      %56 = sbr.rel (0) target = $region21
    $region20: #{tpu_custom_call.1} parent=1 // pred_region
      %58 = dma.done [#allocation3], 256
    $region21: #{tpu_custom_call.1} parent=1 // pred_fallthru
      _
    %59 = vsyncpa [#allocation3], 1

</llo_original>
